<compile_context>
chip_gen: v5e
topology: v5e:2x2
jax: 0.10.0
libtpu: 0.0.40
codegen_flags: <defaults>
</compile_context>

<pallas_src>
import math

import jax
import jax.numpy as jnp
from jax.experimental import pallas as pl
from jax.experimental.pallas import tpu as pltpu


# ----------------------------------------------------------------------------
# BarrettLayer constants (from the PyTorch __init__)
# ----------------------------------------------------------------------------
_Aw = 0.001 * 25
_A1 = 0.001 * 50
_A2 = 0.001 * 70
_Dw = 0.001 * 76
_Dw_knuckle = 0.001 * 42
_phi2 = 0.0
_phi3 = 0.0
_R = (-1.0, 1.0, 0.0)
_J = (1.0, 1.0, -1.0)

_NUM_PARTS = 4  # palm, knuckle, finger, finger_tip


def _round_up(x, m):
    return ((x + m - 1) // m) * m


# ----------------------------------------------------------------------------
# Pallas kernel: single grid step, all parts statically unrolled.
#   t_ref: (P, R_PAD, 4)    packed xyz rows of all transforms (zero padded)
#   v_ref: (P, 4, N_PAD)    homogeneous vertices, lane-dense (zero padded)
#   o_ref: (P, R_PAD, N_PAD)
# ----------------------------------------------------------------------------
def _make_transform_kernel(num_parts):
    def kernel(t_ref, v_ref, o_ref):
        for p in range(num_parts):        # static unroll over parts
            T = t_ref[p]                  # (R_PAD, 4)
            V = v_ref[p]                  # (4, N_PAD)
            # out[r, n] = sum_k T[r, k] * V[k, n]  (unrolled over k; pure VPU)
            acc = T[:, 0:1] * V[0:1, :]
            for k in range(1, 4):
                acc = acc + T[:, k : k + 1] * V[k : k + 1, :]
            o_ref[p] = acc
    return kernel


def transform_all_parts(t_packed, v_packed):
    """Apply packed per-part transforms to packed per-part vertex clouds.

    Args:
      t_packed: (P, R_PAD, 4) float32; rows 3*m+j hold row j of transform m (zero pad).
      v_packed: (P, 4, N_PAD) float32; homogeneous vertices (w row == 1 in valid cols).
    Returns:
      (P, R_PAD, N_PAD) float32 with out[p, 3*m+j, n] = (T_m @ v_n)_j.
    """
    P, r_pad, _ = t_packed.shape
    n_pad = v_packed.shape[-1]
    # TODO(synk): for very large batch sizes, tile the R_PAD axis across a grid marked
    # "parallel" (~128 rows/step) instead of one step, to shard across v7x's 2 TCs.
    return pl.pallas_call(
        _make_transform_kernel(P),
        out_shape=jax.ShapeDtypeStruct((P, r_pad, n_pad), jnp.float32),
        grid_spec=pltpu.PrefetchScalarGridSpec(
            num_scalar_prefetch=0,
            grid=(1,),
            in_specs=[
                pl.BlockSpec((P, r_pad, 4), lambda i: (0, 0, 0)),
                pl.BlockSpec((P, 4, n_pad), lambda i: (0, 0, 0)),
            ],
            out_specs=pl.BlockSpec((P, r_pad, n_pad), lambda i: (0, 0, 0)),
        ),
        compiler_params=pltpu.CompilerParams(dimension_semantics=("arbitrary",)),
    )(t_packed.astype(jnp.float32), v_packed.astype(jnp.float32))


# ----------------------------------------------------------------------------
# DH kinematics (vectorized over an arbitrary trailing batch of joint angles)
# ----------------------------------------------------------------------------
def forward_kinematics(A, alpha, D, theta):
    """DH-style transform. theta: (...,) -> (..., 4, 4). A broadcastable with theta."""
    theta = jnp.asarray(theta, jnp.float32)
    A = jnp.broadcast_to(jnp.asarray(A, jnp.float32), theta.shape)
    c = jnp.cos(theta)
    s = jnp.sin(theta)
    ca = jnp.cos(jnp.float32(alpha))
    sa = jnp.sin(jnp.float32(alpha))
    D = jnp.float32(D)
    z = jnp.zeros_like(theta)
    o = jnp.ones_like(theta)
    row0 = jnp.stack([c, -s, z, A], axis=-1)
    row1 = jnp.stack([s * ca, c * ca, -sa * o, -sa * D * o], axis=-1)
    row2 = jnp.stack([s * sa, c * sa, ca * o, ca * D * o], axis=-1)
    row3 = jnp.stack([z, z, z, o], axis=-1)
    return jnp.stack([row0, row1, row2, row3], axis=-2)


def _pack_transform_rows(T, r_pad):
    """(M, 4, 4) -> (r_pad, 4): xyz rows of each transform stacked, zero padded."""
    rows = T[:, :3, :].reshape(-1, 4)
    return jnp.pad(rows, ((0, r_pad - rows.shape[0]), (0, 0)))


def pack_meshes(meshes):
    """Pad/transpose static meshes once (hoisted out of the forward path).

    Args:
      meshes: list of (N_i, 4) homogeneous vertex arrays (last column must be 1).
    Returns:
      (P, 4, N_PAD) float32 buffer, tuple of per-part vertex counts.
    """
    n_pad = _round_up(max(m.shape[0] for m in meshes), 128)
    packed = []
    for m in meshes:
        m = jnp.asarray(m, jnp.float32)
        buf = jnp.zeros((4, n_pad), jnp.float32).at[:, : m.shape[0]].set(m.T)
        packed.append(buf)
    return jnp.stack(packed), tuple(m.shape[0] for m in meshes)


# ----------------------------------------------------------------------------
# BarrettLayer.forward equivalent
# ----------------------------------------------------------------------------
def barrett_forward(pose, theta, v_packed, part_sizes):
    """Pallas-backed equivalent of BarrettLayer.forward.

    Args:
      pose:  (B, 4, 4) float32 base pose.
      theta: (B, 7) float32 joint angles.
      v_packed: (4, 4, N_PAD) float32 packed meshes (palm, knuckle, finger, finger_tip).
      part_sizes: static tuple (Np, Nk, Nf, Nt) of true vertex counts.
    Returns:
      palm_vertices (B, Np, 3), all_knuckle_vertices (B, 2, Nk, 3),
      all_finger_vertices (B, 3, Nf, 3), all_finger_tip_vertices (B, 3, Nt, 3),
      joints (B, 6, 4, 4)
    """
    B = pose.shape[0]
    Np, Nk, Nf, Nt = part_sizes

    pose = pose.astype(jnp.float32)
    theta = theta.astype(jnp.float32)

    rot_z_90 = jnp.eye(4, dtype=jnp.float32).at[1, 1].set(-1.0).at[2, 3].set(-0.001 * 79)
    pose = pose @ rot_z_90                                    # (B, 4, 4)

    r = jnp.asarray(_R, jnp.float32)
    j = jnp.asarray(_J, jnp.float32)
    theta0 = theta[:, 0:1]                                    # (B, 1)

    # Batched DH chain over all three fingers at once.
    tw1_theta = r[None, :] * theta0 - (math.pi / 2) * j[None, :]            # (B, 3)
    Tw1 = forward_kinematics(r * _Aw, 0.0, _Dw, tw1_theta)                  # (B, 3, 4, 4)
    T12 = forward_kinematics(_A1, math.pi / 2, 0.0, _phi2 + theta[:, 1:4])  # (B, 3, 4, 4)
    T23 = forward_kinematics(_A2, math.pi, 0.0, _phi3 - theta[:, 4:7])      # (B, 3, 4, 4)

    # Knuckles exist only for fingers 0 and 1.
    r_k = jnp.asarray([_R[1], _R[0]], jnp.float32)            # r[(i+1)%2] for i = 0, 1
    tw_k_theta = -(r[None, :2] * theta0 - (math.pi / 2) * j[None, :2])      # (B, 2)
    Tw_knuckle = forward_kinematics(r_k * _Aw, 0.0, _Dw_knuckle, tw_k_theta)

    pose_b = pose[:, None]                                    # (B, 1, 4, 4)
    knuckle_T = pose_b @ Tw_knuckle                           # (B, 2, 4, 4)
    pose_to_T12 = pose_b @ Tw1 @ T12                          # (B, 3, 4, 4)
    pose_to_T23 = pose_to_T12 @ T23                           # (B, 3, 4, 4)

    joints = jnp.stack([pose_to_T12, pose_to_T23], axis=2).reshape(B, 6, 4, 4)

    # Pack all transforms (xyz rows only) for the single Pallas launch.
    m_parts = (B, 2 * B, 3 * B, 3 * B)
    r_pad = _round_up(3 * max(m_parts), 8)
    t_packed = jnp.stack([
        _pack_transform_rows(pose, r_pad),
        _pack_transform_rows(knuckle_T.reshape(-1, 4, 4), r_pad),
        _pack_transform_rows(pose_to_T12.reshape(-1, 4, 4), r_pad),
        _pack_transform_rows(pose_to_T23.reshape(-1, 4, 4), r_pad),
    ])                                                        # (4, r_pad, 4)

    out = transform_all_parts(t_packed, v_packed)             # (4, r_pad, N_PAD)

    def unpack(p, m, n):
        # (r_pad, N_PAD) -> (m, n, 3); transpose left to XLA (tiny tensor).
        return out[p, : 3 * m, :n].reshape(m, 3, n).transpose(0, 2, 1)

    palm_vertices = unpack(0, B, Np)                                      # (B, Np, 3)
    all_knuckle_vertices = unpack(1, 2 * B, Nk).reshape(B, 2, Nk, 3)
    all_finger_vertices = unpack(2, 3 * B, Nf).reshape(B, 3, Nf, 3)
    all_finger_tip_vertices = unpack(3, 3 * B, Nt).reshape(B, 3, Nt, 3)

    return (
        palm_vertices,
        all_knuckle_vertices,
        all_finger_vertices,
        all_finger_tip_vertices,
        joints,
    )


# ----------------------------------------------------------------------------
# Deterministic synthetic inputs + pure-JAX reference for self-checking
# ----------------------------------------------------------------------------
def _make_mesh(key, n):
    # TODO(synk): real BarrettLayer loads trimesh .stl meshes; we synthesize
    # deterministic homogeneous vertex clouds of the same layout (N, 4) instead.
    xyz = jax.random.uniform(key, (n, 3), minval=-0.05, maxval=0.05, dtype=jnp.float32)
    return jnp.concatenate([xyz, jnp.ones((n, 1), jnp.float32)], axis=-1)


def _make_pose(angles, trans):
    B = angles.shape[0]
    c, s = jnp.cos(angles), jnp.sin(angles)
    pose = jnp.tile(jnp.eye(4, dtype=jnp.float32)[None], (B, 1, 1))
    pose = pose.at[:, 0, 0].set(c).at[:, 0, 1].set(-s)
    pose = pose.at[:, 1, 0].set(s).at[:, 1, 1].set(c)
    pose = pose.at[:, :3, 3].set(trans)
    return pose


def _reference_forward(pose, theta, palm, knuckle, finger, finger_tip):
    """Straightforward pure-JAX port of the PyTorch forward (loop over fingers)."""
    rot_z_90 = jnp.eye(4, dtype=jnp.float32).at[1, 1].set(-1.0).at[2, 3].set(-0.001 * 79)
    pose = pose.astype(jnp.float32) @ rot_z_90

    def tf(T, V):
        return jnp.einsum("bjk,nk->bnj", T, V)[:, :, :3]

    palm_v = tf(pose, palm)
    knuckle_v, finger_v, tip_v, joints = [], [], [], []
    for i in range(3):
        Tw1 = forward_kinematics(
            _R[i] * _Aw, 0.0, _Dw, _R[i] * theta[:, 0] - math.pi / 2 * _J[i])
        T12 = forward_kinematics(_A1, math.pi / 2, 0.0, _phi2 + theta[:, i + 1])
        T23 = forward_kinematics(_A2, math.pi, 0.0, _phi3 - theta[:, i + 4])
        if i in (0, 1):
            Tw_knuckle = forward_kinematics(
                _R[(i + 1) % 2] * _Aw, 0.0, _Dw_knuckle,
                -1.0 * (_R[i] * theta[:, 0] - math.pi / 2 * _J[i]))
            knuckle_v.append(tf(pose @ Tw_knuckle, knuckle))
        pose_to_T12 = pose @ Tw1 @ T12
        finger_v.append(tf(pose_to_T12, finger))
        pose_to_T23 = pose_to_T12 @ T23
        tip_v.append(tf(pose_to_T23, finger_tip))
        joints.append(pose_to_T12)
        joints.append(pose_to_T23)
    return (palm_v, jnp.stack(knuckle_v, 1), jnp.stack(finger_v, 1),
            jnp.stack(tip_v, 1), jnp.stack(joints, 1))


if __name__ == "__main__":
    key = jax.random.PRNGKey(0)
    kp, kk, kf, kt, kth = jax.random.split(key, 5)

    B = 2
    palm = _make_mesh(kp, 96)
    knuckle = _make_mesh(kk, 64)
    finger = _make_mesh(kf, 80)
    finger_tip = _make_mesh(kt, 72)

    # Static mesh padding/transposition is done once, outside the forward path.
    v_packed, part_sizes = pack_meshes([palm, knuckle, finger, finger_tip])

    angles = jnp.array([0.3, -0.5], dtype=jnp.float32)
    trans = jnp.array([[0.01, -0.02, 0.03], [-0.04, 0.05, -0.06]], dtype=jnp.float32)
    pose = _make_pose(angles, trans)
    theta = jax.random.uniform(kth, (B, 7), minval=0.0, maxval=1.0, dtype=jnp.float32)

    fwd = jax.jit(barrett_forward, static_argnames=("part_sizes",))
    outs = fwd(pose, theta, v_packed, part_sizes=part_sizes)
    outs = jax.block_until_ready(outs)
    palm_v, knuckle_v, finger_v, tip_v, joints = outs

    # sanity: shapes
    assert palm_v.shape == (B, 96, 3)
    assert knuckle_v.shape == (B, 2, 64, 3)
    assert finger_v.shape == (B, 3, 80, 3)
    assert tip_v.shape == (B, 3, 72, 3)
    assert joints.shape == (B, 6, 4, 4)

    # sanity: Pallas-backed forward matches the straightforward pure-JAX reference
    refs = _reference_forward(pose, theta, palm, knuckle, finger, finger_tip)
    names = ["palm", "knuckle", "finger", "finger_tip", "joints"]
    for name, got, ref in zip(names, outs, refs):
        assert jnp.allclose(got, ref, atol=1e-5), f"{name} mismatch vs reference"

    print("KERNEL_OK")
</pallas_src>

<mosaic_0001>
module attributes {stable_mosaic.version = 11 : i64} {
  func.func @kernel(%arg0: i32, %arg1: memref<4x24x4xf32, #tpu.memory_space<vmem>>, %arg2: memref<4x4x128xf32, #tpu.memory_space<vmem>>, %arg3: memref<4x24x128xf32, #tpu.memory_space<vmem>>) attributes {dimension_semantics = [#tpu.dimension_semantics<arbitrary>], iteration_bounds = array<i64: 1>, scalar_prefetch = 0 : i64, scratch_operands = 0 : i64, tpu.core_type = #tpu.core_type<tc>, window_params = [{pipeline_mode = #tpu.pipeline_mode<synchronous>, transform_indices = @transform_0, window_bounds = array<i64: 4, 24, 4>}, {pipeline_mode = #tpu.pipeline_mode<synchronous>, transform_indices = @transform_1, window_bounds = array<i64: 4, 4, 128>}, {pipeline_mode = #tpu.pipeline_mode<synchronous>, transform_indices = @transform_2, window_bounds = array<i64: 4, 24, 128>}]} {
    %c0 = arith.constant 0 : index
    %c0_0 = arith.constant 0 : index
    %c0_1 = arith.constant 0 : index
    %0 = vector.load %arg1[%c0, %c0_0, %c0_1] : memref<4x24x4xf32, #tpu.memory_space<vmem>>, vector<1x24x4xf32>
    %1 = vector.shape_cast %0 : vector<1x24x4xf32> to vector<24x4xf32>
    %c0_2 = arith.constant 0 : index
    %c0_3 = arith.constant 0 : index
    %c0_4 = arith.constant 0 : index
    %2 = vector.load %arg2[%c0_2, %c0_3, %c0_4] : memref<4x4x128xf32, #tpu.memory_space<vmem>>, vector<1x4x128xf32>
    %3 = vector.shape_cast %2 : vector<1x4x128xf32> to vector<4x128xf32>
    %4 = vector.extract_strided_slice %1 {offsets = [0, 0], sizes = [24, 1], strides = [1, 1]} : vector<24x4xf32> to vector<24x1xf32>
    %5 = vector.extract_strided_slice %3 {offsets = [0, 0], sizes = [1, 128], strides = [1, 1]} : vector<4x128xf32> to vector<1x128xf32>
    %6 = vector.broadcast %4 : vector<24x1xf32> to vector<24x128xf32>
    %7 = vector.broadcast %5 : vector<1x128xf32> to vector<24x128xf32>
    %8 = arith.mulf %6, %7 : vector<24x128xf32>
    %9 = vector.extract_strided_slice %1 {offsets = [0, 1], sizes = [24, 1], strides = [1, 1]} : vector<24x4xf32> to vector<24x1xf32>
    %10 = vector.extract_strided_slice %3 {offsets = [1, 0], sizes = [1, 128], strides = [1, 1]} : vector<4x128xf32> to vector<1x128xf32>
    %11 = vector.broadcast %9 : vector<24x1xf32> to vector<24x128xf32>
    %12 = vector.broadcast %10 : vector<1x128xf32> to vector<24x128xf32>
    %13 = arith.mulf %11, %12 : vector<24x128xf32>
    %14 = arith.addf %8, %13 : vector<24x128xf32>
    %15 = vector.extract_strided_slice %1 {offsets = [0, 2], sizes = [24, 1], strides = [1, 1]} : vector<24x4xf32> to vector<24x1xf32>
    %16 = vector.extract_strided_slice %3 {offsets = [2, 0], sizes = [1, 128], strides = [1, 1]} : vector<4x128xf32> to vector<1x128xf32>
    %17 = vector.broadcast %15 : vector<24x1xf32> to vector<24x128xf32>
    %18 = vector.broadcast %16 : vector<1x128xf32> to vector<24x128xf32>
    %19 = arith.mulf %17, %18 : vector<24x128xf32>
    %20 = arith.addf %14, %19 : vector<24x128xf32>
    %21 = vector.extract_strided_slice %1 {offsets = [0, 3], sizes = [24, 1], strides = [1, 1]} : vector<24x4xf32> to vector<24x1xf32>
    %22 = vector.extract_strided_slice %3 {offsets = [3, 0], sizes = [1, 128], strides = [1, 1]} : vector<4x128xf32> to vector<1x128xf32>
    %23 = vector.broadcast %21 : vector<24x1xf32> to vector<24x128xf32>
    %24 = vector.broadcast %22 : vector<1x128xf32> to vector<24x128xf32>
    %25 = arith.mulf %23, %24 : vector<24x128xf32>
    %26 = arith.addf %20, %25 : vector<24x128xf32>
    %c0_5 = arith.constant 0 : index
    %c0_6 = arith.constant 0 : index
    %c0_7 = arith.constant 0 : index
    %27 = vector.load %arg3[%c0_5, %c0_6, %c0_7] : memref<4x24x128xf32, #tpu.memory_space<vmem>>, vector<1x24x128xf32>
    %28 = vector.shape_cast %27 : vector<1x24x128xf32> to vector<24x128xf32>
    %29 = vector.shape_cast %26 : vector<24x128xf32> to vector<1x24x128xf32>
    tpu.vector_store %arg3[%c0_5, %c0_6, %c0_7], %29 {strides = array<i32>} : memref<4x24x128xf32, #tpu.memory_space<vmem>>, vector<1x24x128xf32>,
    %c1 = arith.constant 1 : index
    %c0_8 = arith.constant 0 : index
    %c0_9 = arith.constant 0 : index
    %30 = vector.load %arg1[%c1, %c0_8, %c0_9] : memref<4x24x4xf32, #tpu.memory_space<vmem>>, vector<1x24x4xf32>
    %31 = vector.shape_cast %30 : vector<1x24x4xf32> to vector<24x4xf32>
    %c1_10 = arith.constant 1 : index
    %c0_11 = arith.constant 0 : index
    %c0_12 = arith.constant 0 : index
    %32 = vector.load %arg2[%c1_10, %c0_11, %c0_12] : memref<4x4x128xf32, #tpu.memory_space<vmem>>, vector<1x4x128xf32>
    %33 = vector.shape_cast %32 : vector<1x4x128xf32> to vector<4x128xf32>
    %34 = vector.extract_strided_slice %31 {offsets = [0, 0], sizes = [24, 1], strides = [1, 1]} : vector<24x4xf32> to vector<24x1xf32>
    %35 = vector.extract_strided_slice %33 {offsets = [0, 0], sizes = [1, 128], strides = [1, 1]} : vector<4x128xf32> to vector<1x128xf32>
    %36 = vector.broadcast %34 : vector<24x1xf32> to vector<24x128xf32>
    %37 = vector.broadcast %35 : vector<1x128xf32> to vector<24x128xf32>
    %38 = arith.mulf %36, %37 : vector<24x128xf32>
    %39 = vector.extract_strided_slice %31 {offsets = [0, 1], sizes = [24, 1], strides = [1, 1]} : vector<24x4xf32> to vector<24x1xf32>
    %40 = vector.extract_strided_slice %33 {offsets = [1, 0], sizes = [1, 128], strides = [1, 1]} : vector<4x128xf32> to vector<1x128xf32>
    %41 = vector.broadcast %39 : vector<24x1xf32> to vector<24x128xf32>
    %42 = vector.broadcast %40 : vector<1x128xf32> to vector<24x128xf32>
    %43 = arith.mulf %41, %42 : vector<24x128xf32>
    %44 = arith.addf %38, %43 : vector<24x128xf32>
    %45 = vector.extract_strided_slice %31 {offsets = [0, 2], sizes = [24, 1], strides = [1, 1]} : vector<24x4xf32> to vector<24x1xf32>
    %46 = vector.extract_strided_slice %33 {offsets = [2, 0], sizes = [1, 128], strides = [1, 1]} : vector<4x128xf32> to vector<1x128xf32>
    %47 = vector.broadcast %45 : vector<24x1xf32> to vector<24x128xf32>
    %48 = vector.broadcast %46 : vector<1x128xf32> to vector<24x128xf32>
    %49 = arith.mulf %47, %48 : vector<24x128xf32>
    %50 = arith.addf %44, %49 : vector<24x128xf32>
    %51 = vector.extract_strided_slice %31 {offsets = [0, 3], sizes = [24, 1], strides = [1, 1]} : vector<24x4xf32> to vector<24x1xf32>
    %52 = vector.extract_strided_slice %33 {offsets = [3, 0], sizes = [1, 128], strides = [1, 1]} : vector<4x128xf32> to vector<1x128xf32>
    %53 = vector.broadcast %51 : vector<24x1xf32> to vector<24x128xf32>
    %54 = vector.broadcast %52 : vector<1x128xf32> to vector<24x128xf32>
    %55 = arith.mulf %53, %54 : vector<24x128xf32>
    %56 = arith.addf %50, %55 : vector<24x128xf32>
    %c1_13 = arith.constant 1 : index
    %c0_14 = arith.constant 0 : index
    %c0_15 = arith.constant 0 : index
    %57 = vector.load %arg3[%c1_13, %c0_14, %c0_15] : memref<4x24x128xf32, #tpu.memory_space<vmem>>, vector<1x24x128xf32>
    %58 = vector.shape_cast %57 : vector<1x24x128xf32> to vector<24x128xf32>
    %59 = vector.shape_cast %56 : vector<24x128xf32> to vector<1x24x128xf32>
    tpu.vector_store %arg3[%c1_13, %c0_14, %c0_15], %59 {strides = array<i32>} : memref<4x24x128xf32, #tpu.memory_space<vmem>>, vector<1x24x128xf32>,
    %c2 = arith.constant 2 : index
    %c0_16 = arith.constant 0 : index
    %c0_17 = arith.constant 0 : index
    %60 = vector.load %arg1[%c2, %c0_16, %c0_17] : memref<4x24x4xf32, #tpu.memory_space<vmem>>, vector<1x24x4xf32>
    %61 = vector.shape_cast %60 : vector<1x24x4xf32> to vector<24x4xf32>
    %c2_18 = arith.constant 2 : index
    %c0_19 = arith.constant 0 : index
    %c0_20 = arith.constant 0 : index
    %62 = vector.load %arg2[%c2_18, %c0_19, %c0_20] : memref<4x4x128xf32, #tpu.memory_space<vmem>>, vector<1x4x128xf32>
    %63 = vector.shape_cast %62 : vector<1x4x128xf32> to vector<4x128xf32>
    %64 = vector.extract_strided_slice %61 {offsets = [0, 0], sizes = [24, 1], strides = [1, 1]} : vector<24x4xf32> to vector<24x1xf32>
    %65 = vector.extract_strided_slice %63 {offsets = [0, 0], sizes = [1, 128], strides = [1, 1]} : vector<4x128xf32> to vector<1x128xf32>
    %66 = vector.broadcast %64 : vector<24x1xf32> to vector<24x128xf32>
    %67 = vector.broadcast %65 : vector<1x128xf32> to vector<24x128xf32>
    %68 = arith.mulf %66, %67 : vector<24x128xf32>
    %69 = vector.extract_strided_slice %61 {offsets = [0, 1], sizes = [24, 1], strides = [1, 1]} : vector<24x4xf32> to vector<24x1xf32>
    %70 = vector.extract_strided_slice %63 {offsets = [1, 0], sizes = [1, 128], strides = [1, 1]} : vector<4x128xf32> to vector<1x128xf32>
    %71 = vector.broadcast %69 : vector<24x1xf32> to vector<24x128xf32>
    %72 = vector.broadcast %70 : vector<1x128xf32> to vector<24x128xf32>
    %73 = arith.mulf %71, %72 : vector<24x128xf32>
    %74 = arith.addf %68, %73 : vector<24x128xf32>
    %75 = vector.extract_strided_slice %61 {offsets = [0, 2], sizes = [24, 1], strides = [1, 1]} : vector<24x4xf32> to vector<24x1xf32>
    %76 = vector.extract_strided_slice %63 {offsets = [2, 0], sizes = [1, 128], strides = [1, 1]} : vector<4x128xf32> to vector<1x128xf32>
    %77 = vector.broadcast %75 : vector<24x1xf32> to vector<24x128xf32>
    %78 = vector.broadcast %76 : vector<1x128xf32> to vector<24x128xf32>
    %79 = arith.mulf %77, %78 : vector<24x128xf32>
    %80 = arith.addf %74, %79 : vector<24x128xf32>
    %81 = vector.extract_strided_slice %61 {offsets = [0, 3], sizes = [24, 1], strides = [1, 1]} : vector<24x4xf32> to vector<24x1xf32>
    %82 = vector.extract_strided_slice %63 {offsets = [3, 0], sizes = [1, 128], strides = [1, 1]} : vector<4x128xf32> to vector<1x128xf32>
    %83 = vector.broadcast %81 : vector<24x1xf32> to vector<24x128xf32>
    %84 = vector.broadcast %82 : vector<1x128xf32> to vector<24x128xf32>
    %85 = arith.mulf %83, %84 : vector<24x128xf32>
    %86 = arith.addf %80, %85 : vector<24x128xf32>
    %c2_21 = arith.constant 2 : index
    %c0_22 = arith.constant 0 : index
    %c0_23 = arith.constant 0 : index
    %87 = vector.load %arg3[%c2_21, %c0_22, %c0_23] : memref<4x24x128xf32, #tpu.memory_space<vmem>>, vector<1x24x128xf32>
    %88 = vector.shape_cast %87 : vector<1x24x128xf32> to vector<24x128xf32>
    %89 = vector.shape_cast %86 : vector<24x128xf32> to vector<1x24x128xf32>
    tpu.vector_store %arg3[%c2_21, %c0_22, %c0_23], %89 {strides = array<i32>} : memref<4x24x128xf32, #tpu.memory_space<vmem>>, vector<1x24x128xf32>,
    %c3 = arith.constant 3 : index
    %c0_24 = arith.constant 0 : index
    %c0_25 = arith.constant 0 : index
    %90 = vector.load %arg1[%c3, %c0_24, %c0_25] : memref<4x24x4xf32, #tpu.memory_space<vmem>>, vector<1x24x4xf32>
    %91 = vector.shape_cast %90 : vector<1x24x4xf32> to vector<24x4xf32>
    %c3_26 = arith.constant 3 : index
    %c0_27 = arith.constant 0 : index
    %c0_28 = arith.constant 0 : index
    %92 = vector.load %arg2[%c3_26, %c0_27, %c0_28] : memref<4x4x128xf32, #tpu.memory_space<vmem>>, vector<1x4x128xf32>
    %93 = vector.shape_cast %92 : vector<1x4x128xf32> to vector<4x128xf32>
    %94 = vector.extract_strided_slice %91 {offsets = [0, 0], sizes = [24, 1], strides = [1, 1]} : vector<24x4xf32> to vector<24x1xf32>
    %95 = vector.extract_strided_slice %93 {offsets = [0, 0], sizes = [1, 128], strides = [1, 1]} : vector<4x128xf32> to vector<1x128xf32>
    %96 = vector.broadcast %94 : vector<24x1xf32> to vector<24x128xf32>
    %97 = vector.broadcast %95 : vector<1x128xf32> to vector<24x128xf32>
    %98 = arith.mulf %96, %97 : vector<24x128xf32>
    %99 = vector.extract_strided_slice %91 {offsets = [0, 1], sizes = [24, 1], strides = [1, 1]} : vector<24x4xf32> to vector<24x1xf32>
    %100 = vector.extract_strided_slice %93 {offsets = [1, 0], sizes = [1, 128], strides = [1, 1]} : vector<4x128xf32> to vector<1x128xf32>
    %101 = vector.broadcast %99 : vector<24x1xf32> to vector<24x128xf32>
    %102 = vector.broadcast %100 : vector<1x128xf32> to vector<24x128xf32>
    %103 = arith.mulf %101, %102 : vector<24x128xf32>
    %104 = arith.addf %98, %103 : vector<24x128xf32>
    %105 = vector.extract_strided_slice %91 {offsets = [0, 2], sizes = [24, 1], strides = [1, 1]} : vector<24x4xf32> to vector<24x1xf32>
    %106 = vector.extract_strided_slice %93 {offsets = [2, 0], sizes = [1, 128], strides = [1, 1]} : vector<4x128xf32> to vector<1x128xf32>
    %107 = vector.broadcast %105 : vector<24x1xf32> to vector<24x128xf32>
    %108 = vector.broadcast %106 : vector<1x128xf32> to vector<24x128xf32>
    %109 = arith.mulf %107, %108 : vector<24x128xf32>
    %110 = arith.addf %104, %109 : vector<24x128xf32>
    %111 = vector.extract_strided_slice %91 {offsets = [0, 3], sizes = [24, 1], strides = [1, 1]} : vector<24x4xf32> to vector<24x1xf32>
    %112 = vector.extract_strided_slice %93 {offsets = [3, 0], sizes = [1, 128], strides = [1, 1]} : vector<4x128xf32> to vector<1x128xf32>
    %113 = vector.broadcast %111 : vector<24x1xf32> to vector<24x128xf32>
    %114 = vector.broadcast %112 : vector<1x128xf32> to vector<24x128xf32>
    %115 = arith.mulf %113, %114 : vector<24x128xf32>
    %116 = arith.addf %110, %115 : vector<24x128xf32>
    %c3_29 = arith.constant 3 : index
    %c0_30 = arith.constant 0 : index
    %c0_31 = arith.constant 0 : index
    %117 = vector.load %arg3[%c3_29, %c0_30, %c0_31] : memref<4x24x128xf32, #tpu.memory_space<vmem>>, vector<1x24x128xf32>
    %118 = vector.shape_cast %117 : vector<1x24x128xf32> to vector<24x128xf32>
    %119 = vector.shape_cast %116 : vector<24x128xf32> to vector<1x24x128xf32>
    tpu.vector_store %arg3[%c3_29, %c0_30, %c0_31], %119 {strides = array<i32>} : memref<4x24x128xf32, #tpu.memory_space<vmem>>, vector<1x24x128xf32>,
    return
  }
  func.func @transform_0(%arg0: i32) -> (i32, i32, i32) {
    %c0_i32 = arith.constant 0 : i32
    %c0_i32_0 = arith.constant 0 : i32
    %c0_i32_1 = arith.constant 0 : i32
    %c0_i32_2 = arith.constant 0 : i32
    return %c0_i32, %c0_i32_0, %c0_i32_1 : i32, i32, i32
  }
  func.func @transform_1(%arg0: i32) -> (i32, i32, i32) {
    %c0_i32 = arith.constant 0 : i32
    %c0_i32_0 = arith.constant 0 : i32
    %c0_i32_1 = arith.constant 0 : i32
    %c0_i32_2 = arith.constant 0 : i32
    return %c0_i32, %c0_i32_0, %c0_i32_1 : i32, i32, i32
  }
  func.func @transform_2(%arg0: i32) -> (i32, i32, i32) {
    %c0_i32 = arith.constant 0 : i32
    %c0_i32_0 = arith.constant 0 : i32
    %c0_i32_1 = arith.constant 0 : i32
    %c0_i32_2 = arith.constant 0 : i32
    return %c0_i32, %c0_i32_0, %c0_i32_1 : i32, i32, i32
  }
}

</mosaic_0001>

<llo_original>
// kernel: squeeze.4
$region0: #{squeeze.4}
  %s0 = inlined_call_operand.vmem [shape: f32[1,6,96], index: 0, kind: input, shape index: {}]
  %s1 = inlined_call_operand.vmem [shape: f32[2,3,96], index: 1, kind: output, shape index: {}]
  $region1: #{squeeze.4} parent=0
    #allocation0 [shape = 'u8[8192]{0}', space=vmem, size = 0x2000, scoped, tag = 'scoped mem for output reshape']
    %v2 = vld [vmem:[%s0] sm:$0x3f]
    %vm3 = vcmask 785408
    %4 = vst.msk [vmem:[#allocation0] sm:$0x7] %vm3, %v2
    %s5 = scalar_lea.vmem [#allocation0], 5
    %6 = vst.msk [vmem:[%s5] sm:$0x38] %vm3, %v2
    %s8 = ssub.s32 16, 1
    %v9 = vld [vmem:[#allocation0] sm:%s8]
    %s11 = ssub.s32 16, 1
    %12 = vst [vmem:[%s1] sm:%s11] %v9
    %s13 = scalar_lea.vmem [#allocation0], 8
    %v14 = vld [vmem:[%s13] sm:%s8]
    %s16 = ssub.s32 16, 1
    %s17 = scalar_lea.vmem %s1, 4
    %18 = vst [vmem:[%s17] sm:%s16] %v14

// kernel: squeeze.5
$region0: #{squeeze.5}
  %s0 = inlined_call_operand.vmem [shape: f32[1,12,64], index: 0, kind: input, shape index: {}]
  %s1 = inlined_call_operand.vmem [shape: f32[4,3,64], index: 1, kind: output, shape index: {}]
  $region1: #{squeeze.5} parent=0
    #allocation0 [shape = 'u8[16384]{0}', space=vmem, size = 0x4000, scoped, tag = 'scoped mem for output reshape']
    %v2 = vld [vmem:[%s0] sm:$0xff]
    %vm3 = vcmask 523264
    %4 = vst.msk [vmem:[#allocation0] sm:$0x7] %vm3, %v2
    %s5 = scalar_lea.vmem [#allocation0], 5
    %6 = vst.msk [vmem:[%s5] sm:$0x38] %vm3, %v2
    %s7 = scalar_lea.vmem [#allocation0], 10
    %8 = vst.msk [vmem:[%s7] sm:$0xc0] %vm3, %v2
    %s9 = scalar_lea.vmem %s0, 8
    %v10 = vld [vmem:[%s9] sm:$0xf]
    %vm11 = vcmask 523264
    %s12 = scalar_lea.vmem [#allocation0], 18
    %13 = vst.msk [vmem:[%s12] ss:$6 sm:$0x3] %vm11, %v10
    %s14 = scalar_lea.vmem [#allocation0], 23
    %15 = vst.msk [vmem:[%s14] sm:$0xc] %vm11, %v10
    %s17 = ssub.s32 16, 1
    %v18 = vld [vmem:[#allocation0] sm:%s17]
    %s20 = ssub.s32 16, 1
    %21 = vst [vmem:[%s1] sm:%s20] %v18
    %s22 = scalar_lea.vmem [#allocation0], 8
    %v23 = vld [vmem:[%s22] sm:%s17]
    %s25 = ssub.s32 16, 1
    %s26 = scalar_lea.vmem %s1, 4
    %27 = vst [vmem:[%s26] sm:%s25] %v23
    %s28 = scalar_lea.vmem [#allocation0], 16
    %v29 = vld [vmem:[%s28] sm:%s17]
    %s31 = ssub.s32 16, 1
    %s32 = scalar_lea.vmem %s1, 8
    %33 = vst [vmem:[%s32] sm:%s31] %v29
    %s34 = scalar_lea.vmem [#allocation0], 24
    %v35 = vld [vmem:[%s34] sm:%s17]
    %s37 = ssub.s32 16, 1
    %s38 = scalar_lea.vmem %s1, 12
    %39 = vst [vmem:[%s38] sm:%s37] %v35

// kernel: squeeze.6
$region0: #{squeeze.6}
  %s0 = inlined_call_operand.vmem [shape: f32[1,18,80], index: 0, kind: input, shape index: {}]
  %s1 = inlined_call_operand.vmem [shape: f32[6,3,80], index: 1, kind: output, shape index: {}]
  $region1: #{squeeze.6} parent=0
    #allocation0 [shape = 'u8[24576]{0}', space=vmem, size = 0x6000, scoped, tag = 'scoped mem for output reshape']
    %v2 = vld [vmem:[%s0] sm:$0xff]
    %vm3 = vcmask 654336
    %4 = vst.msk [vmem:[#allocation0] sm:$0x7] %vm3, %v2
    %s5 = scalar_lea.vmem [#allocation0], 5
    %6 = vst.msk [vmem:[%s5] sm:$0x38] %vm3, %v2
    %s7 = scalar_lea.vmem [#allocation0], 10
    %8 = vst.msk [vmem:[%s7] sm:$0xc0] %vm3, %v2
    %s9 = scalar_lea.vmem %s0, 8
    %v10 = vld [vmem:[%s9] sm:$0xff]
    %vm11 = vcmask 654336
    %s12 = scalar_lea.vmem [#allocation0], 18
    %13 = vst.msk [vmem:[%s12] ss:$6 sm:$0x3] %vm11, %v10
    %s14 = scalar_lea.vmem [#allocation0], 23
    %15 = vst.msk [vmem:[%s14] sm:$0xc] %vm11, %v10
    %s16 = scalar_lea.vmem [#allocation0], 28
    %17 = vst.msk [vmem:[%s16] sm:$0x70] %vm11, %v10
    %s18 = scalar_lea.vmem [#allocation0], 33
    %19 = vst.msk [vmem:[%s18] sm:$0x80] %vm11, %v10
    %s20 = scalar_lea.vmem %s0, 16
    %v21 = vld [vmem:[%s20] sm:$0x3]
    %vm22 = vcmask 654336
    %s23 = scalar_lea.vmem [#allocation0], 41
    %24 = vst.msk [vmem:[%s23] sm:$0x3] %vm22, %v21
    %s26 = ssub.s32 16, 1
    %v27 = vld [vmem:[#allocation0] sm:%s26]
    %s29 = ssub.s32 16, 1
    %30 = vst [vmem:[%s1] sm:%s29] %v27
    %s31 = scalar_lea.vmem [#allocation0], 8
    %v32 = vld [vmem:[%s31] sm:%s26]
    %s34 = ssub.s32 16, 1
    %s35 = scalar_lea.vmem %s1, 4
    %36 = vst [vmem:[%s35] sm:%s34] %v32
    %s37 = scalar_lea.vmem [#allocation0], 16
    %v38 = vld [vmem:[%s37] sm:%s26]
    %s40 = ssub.s32 16, 1
    %s41 = scalar_lea.vmem %s1, 8
    %42 = vst [vmem:[%s41] sm:%s40] %v38
    %s43 = scalar_lea.vmem [#allocation0], 24
    %v44 = vld [vmem:[%s43] sm:%s26]
    %s46 = ssub.s32 16, 1
    %s47 = scalar_lea.vmem %s1, 12
    %48 = vst [vmem:[%s47] sm:%s46] %v44
    %s49 = scalar_lea.vmem [#allocation0], 32
    %v50 = vld [vmem:[%s49] sm:%s26]
    %s52 = ssub.s32 16, 1
    %s53 = scalar_lea.vmem %s1, 16
    %54 = vst [vmem:[%s53] sm:%s52] %v50
    %s55 = scalar_lea.vmem [#allocation0], 40
    %v56 = vld [vmem:[%s55] sm:%s26]
    %s58 = ssub.s32 16, 1
    %s59 = scalar_lea.vmem %s1, 20
    %60 = vst [vmem:[%s59] sm:%s58] %v56

// kernel: squeeze.7
$region0: #{squeeze.7}
  %s0 = inlined_call_operand.vmem [shape: f32[1,18,72], index: 0, kind: input, shape index: {}]
  %s1 = inlined_call_operand.vmem [shape: f32[6,3,72], index: 1, kind: output, shape index: {}]
  $region1: #{squeeze.7} parent=0
    #allocation0 [shape = 'u8[24576]{0}', space=vmem, size = 0x6000, scoped, tag = 'scoped mem for output reshape']
    %v2 = vld [vmem:[%s0] sm:$0xff]
    %vm3 = vcmask 588800
    %4 = vst.msk [vmem:[#allocation0] sm:$0x7] %vm3, %v2
    %s5 = scalar_lea.vmem [#allocation0], 5
    %6 = vst.msk [vmem:[%s5] sm:$0x38] %vm3, %v2
    %s7 = scalar_lea.vmem [#allocation0], 10
    %8 = vst.msk [vmem:[%s7] sm:$0xc0] %vm3, %v2
    %s9 = scalar_lea.vmem %s0, 8
    %v10 = vld [vmem:[%s9] sm:$0xff]
    %vm11 = vcmask 588800
    %s12 = scalar_lea.vmem [#allocation0], 18
    %13 = vst.msk [vmem:[%s12] ss:$6 sm:$0x3] %vm11, %v10
    %s14 = scalar_lea.vmem [#allocation0], 23
    %15 = vst.msk [vmem:[%s14] sm:$0xc] %vm11, %v10
    %s16 = scalar_lea.vmem [#allocation0], 28
    %17 = vst.msk [vmem:[%s16] sm:$0x70] %vm11, %v10
    %s18 = scalar_lea.vmem [#allocation0], 33
    %19 = vst.msk [vmem:[%s18] sm:$0x80] %vm11, %v10
    %s20 = scalar_lea.vmem %s0, 16
    %v21 = vld [vmem:[%s20] sm:$0x3]
    %vm22 = vcmask 588800
    %s23 = scalar_lea.vmem [#allocation0], 41
    %24 = vst.msk [vmem:[%s23] sm:$0x3] %vm22, %v21
    %s26 = ssub.s32 16, 1
    %v27 = vld [vmem:[#allocation0] sm:%s26]
    %s29 = ssub.s32 16, 1
    %30 = vst [vmem:[%s1] sm:%s29] %v27
    %s31 = scalar_lea.vmem [#allocation0], 8
    %v32 = vld [vmem:[%s31] sm:%s26]
    %s34 = ssub.s32 16, 1
    %s35 = scalar_lea.vmem %s1, 4
    %36 = vst [vmem:[%s35] sm:%s34] %v32
    %s37 = scalar_lea.vmem [#allocation0], 16
    %v38 = vld [vmem:[%s37] sm:%s26]
    %s40 = ssub.s32 16, 1
    %s41 = scalar_lea.vmem %s1, 8
    %42 = vst [vmem:[%s41] sm:%s40] %v38
    %s43 = scalar_lea.vmem [#allocation0], 24
    %v44 = vld [vmem:[%s43] sm:%s26]
    %s46 = ssub.s32 16, 1
    %s47 = scalar_lea.vmem %s1, 12
    %48 = vst [vmem:[%s47] sm:%s46] %v44
    %s49 = scalar_lea.vmem [#allocation0], 32
    %v50 = vld [vmem:[%s49] sm:%s26]
    %s52 = ssub.s32 16, 1
    %s53 = scalar_lea.vmem %s1, 16
    %54 = vst [vmem:[%s53] sm:%s52] %v50
    %s55 = scalar_lea.vmem [#allocation0], 40
    %v56 = vld [vmem:[%s55] sm:%s26]
    %s58 = ssub.s32 16, 1
    %s59 = scalar_lea.vmem %s1, 20
    %60 = vst [vmem:[%s59] sm:%s58] %v56

// kernel: barrett_forward.1
$region0: #{barrett_forward.1}
  #allocation0 [shape = 'u32[]', space=smem, size = 0x4, offset = 0x4, fixed_abs, tag = 'smem constant byte address 0x4 - core index']
  #allocation1 [shape = 'u32[72,128]{1,0:T(1,128)}', space=vmem, size = 0x9000, scoped, tag = 'internal scratch']
  %s0 = inlined_call_operand.vmem [shape: f32[4,24,4], index: 0, kind: input, shape index: {}]
  %s1 = inlined_call_operand.vmem [shape: f32[4,4,128], index: 1, kind: input, shape index: {}]
  %s2 = inlined_call_operand.vmem [shape: f32[4,24,128], index: 2, kind: output, shape index: {}]
  %s3 = sld [smem:[#allocation0]]
  $region18: #{barrett_forward.1} parent=0
    _
  %s5 = ssub.s32 1, %s3
  %s6 = scalar_select 0, %s5, %s3
  // Predicated region
  $region2: #{barrett_forward.1} parent=0 // pred_check
    _
  $region3: #{barrett_forward.1} parent=0 // pred_check_branch
    %8 = sbr.rel (0) target = $region5
  $region4: #{barrett_forward.1} parent=0 // pred_region
    _
  $region5: #{barrett_forward.1} parent=0 // pred_fallthru
    _
  // Predicated region
  $region6: #{barrett_forward.1} parent=0 // pred_check
    _
  $region7: #{barrett_forward.1} parent=0 // pred_check_branch
    %10 = sbr.rel (0) target = $region9
  $region8: #{barrett_forward.1} parent=0 // pred_region
    _
  $region9: #{barrett_forward.1} parent=0 // pred_fallthru
    _
  %v11 = vld [vmem:[%s0] sm:$0xff]
  %v12 = vld [vmem:[%s0 + $0x8] sm:$0xff]
  %v13 = vld [vmem:[%s0 + $0x10] sm:$0xff]
  %v14 = vld [vmem:[%s1] sm:$0xf]
  %16 = vset.pattern.permute.xlu0 0
  %17 = vperm.xlu0 %16, %v11
  %v18 = vpop.permute.xlu0 %17
  %21 = vset.pattern.permute.xlu0 0
  %22 = vperm.xlu0 %21, %v12
  %v23 = vpop.permute.xlu0 %22
  %26 = vset.pattern.permute.xlu0 0
  %27 = vperm.xlu0 %26, %v13
  %v28 = vpop.permute.xlu0 %27
  %v30 = vperm.slane %v14, 0
  %v31 = vmul.f32 %v18, %v30
  %v32 = vmul.f32 %v23, %v30
  %v33 = vmul.f32 %v28, %v30
  %34 = vset.pattern.permute.xlu0 1
  %35 = vperm.xlu0 %34, %v11
  %v36 = vpop.permute.xlu0 %35
  %38 = vset.pattern.permute.xlu0 1
  %39 = vperm.xlu0 %38, %v12
  %v40 = vpop.permute.xlu0 %39
  %42 = vset.pattern.permute.xlu0 1
  %43 = vperm.xlu0 %42, %v13
  %v44 = vpop.permute.xlu0 %43
  %v46 = vperm.slane %v14, 1
  %v47 = vmul.f32 %v36, %v46
  %v48 = vmul.f32 %v40, %v46
  %v49 = vmul.f32 %v44, %v46
  %v50 = vadd.f32 %v31, %v47
  %v51 = vadd.f32 %v32, %v48
  %v52 = vadd.f32 %v33, %v49
  %53 = vset.pattern.permute.xlu0 2
  %54 = vperm.xlu0 %53, %v11
  %v55 = vpop.permute.xlu0 %54
  %57 = vset.pattern.permute.xlu0 2
  %58 = vperm.xlu0 %57, %v12
  %v59 = vpop.permute.xlu0 %58
  %61 = vset.pattern.permute.xlu0 2
  %62 = vperm.xlu0 %61, %v13
  %v63 = vpop.permute.xlu0 %62
  %v65 = vperm.slane %v14, 2
  %v66 = vmul.f32 %v55, %v65
  %v67 = vmul.f32 %v59, %v65
  %v68 = vmul.f32 %v63, %v65
  %v69 = vadd.f32 %v50, %v66
  %v70 = vadd.f32 %v51, %v67
  %v71 = vadd.f32 %v52, %v68
  %72 = vset.pattern.permute.xlu0 3
  %73 = vperm.xlu0 %72, %v11
  %v74 = vpop.permute.xlu0 %73
  %76 = vset.pattern.permute.xlu0 3
  %77 = vperm.xlu0 %76, %v12
  %v78 = vpop.permute.xlu0 %77
  %80 = vset.pattern.permute.xlu0 3
  %81 = vperm.xlu0 %80, %v13
  %v82 = vpop.permute.xlu0 %81
  %v84 = vperm.slane %v14, 3
  %v85 = vmul.f32 %v74, %v84
  %v86 = vmul.f32 %v78, %v84
  %v87 = vmul.f32 %v82, %v84
  %v88 = vadd.f32 %v69, %v85
  %v89 = vadd.f32 %v70, %v86
  %v90 = vadd.f32 %v71, %v87
  %91 = vst [vmem:[%s2] sm:$0xff] %v88
  %92 = vst [vmem:[%s2 + $0x8] sm:$0xff] %v89
  %93 = vst [vmem:[%s2 + $0x10] sm:$0xff] %v90
  %s94 = scalar_lea.vmem %s0, 24
  %v95 = vld [vmem:[%s94] sm:$0xff]
  %v96 = vld [vmem:[%s94 + $0x8] sm:$0xff]
  %v97 = vld [vmem:[%s94 + $0x10] sm:$0xff]
  %s98 = scalar_lea.vmem %s1, 4
  %v99 = vld [vmem:[%s98] sm:$0xf]
  %101 = vset.pattern.permute.xlu0 0
  %102 = vperm.xlu0 %101, %v95
  %v103 = vpop.permute.xlu0 %102
  %106 = vset.pattern.permute.xlu0 0
  %107 = vperm.xlu0 %106, %v96
  %v108 = vpop.permute.xlu0 %107
  %111 = vset.pattern.permute.xlu0 0
  %112 = vperm.xlu0 %111, %v97
  %v113 = vpop.permute.xlu0 %112
  %v115 = vperm.slane %v99, 0
  %v116 = vmul.f32 %v103, %v115
  %v117 = vmul.f32 %v108, %v115
  %v118 = vmul.f32 %v113, %v115
  %119 = vset.pattern.permute.xlu0 1
  %120 = vperm.xlu0 %119, %v95
  %v121 = vpop.permute.xlu0 %120
  %123 = vset.pattern.permute.xlu0 1
  %124 = vperm.xlu0 %123, %v96
  %v125 = vpop.permute.xlu0 %124
  %127 = vset.pattern.permute.xlu0 1
  %128 = vperm.xlu0 %127, %v97
  %v129 = vpop.permute.xlu0 %128
  %v131 = vperm.slane %v99, 1
  %v132 = vmul.f32 %v121, %v131
  %v133 = vmul.f32 %v125, %v131
  %v134 = vmul.f32 %v129, %v131
  %v135 = vadd.f32 %v116, %v132
  %v136 = vadd.f32 %v117, %v133
  %v137 = vadd.f32 %v118, %v134
  %138 = vset.pattern.permute.xlu0 2
  %139 = vperm.xlu0 %138, %v95
  %v140 = vpop.permute.xlu0 %139
  %142 = vset.pattern.permute.xlu0 2
  %143 = vperm.xlu0 %142, %v96
  %v144 = vpop.permute.xlu0 %143
  %146 = vset.pattern.permute.xlu0 2
  %147 = vperm.xlu0 %146, %v97
  %v148 = vpop.permute.xlu0 %147
  %v150 = vperm.slane %v99, 2
  %v151 = vmul.f32 %v140, %v150
  %v152 = vmul.f32 %v144, %v150
  %v153 = vmul.f32 %v148, %v150
  %v154 = vadd.f32 %v135, %v151
  %v155 = vadd.f32 %v136, %v152
  %v156 = vadd.f32 %v137, %v153
  %157 = vset.pattern.permute.xlu0 3
  %158 = vperm.xlu0 %157, %v95
  %v159 = vpop.permute.xlu0 %158
  %161 = vset.pattern.permute.xlu0 3
  %162 = vperm.xlu0 %161, %v96
  %v163 = vpop.permute.xlu0 %162
  %165 = vset.pattern.permute.xlu0 3
  %166 = vperm.xlu0 %165, %v97
  %v167 = vpop.permute.xlu0 %166
  %v169 = vperm.slane %v99, 3
  %v170 = vmul.f32 %v159, %v169
  %v171 = vmul.f32 %v163, %v169
  %v172 = vmul.f32 %v167, %v169
  %v173 = vadd.f32 %v154, %v170
  %v174 = vadd.f32 %v155, %v171
  %v175 = vadd.f32 %v156, %v172
  %s176 = scalar_lea.vmem %s2, 24
  %177 = vst [vmem:[%s176] sm:$0xff] %v173
  %178 = vst [vmem:[%s176 + $0x8] sm:$0xff] %v174
  %179 = vst [vmem:[%s176 + $0x10] sm:$0xff] %v175
  %s180 = scalar_lea.vmem %s0, 48
  %v181 = vld [vmem:[%s180] sm:$0xff]
  %v182 = vld [vmem:[%s180 + $0x8] sm:$0xff]
  %v183 = vld [vmem:[%s180 + $0x10] sm:$0xff]
  %s184 = scalar_lea.vmem %s1, 8
  %v185 = vld [vmem:[%s184] sm:$0xf]
  %187 = vset.pattern.permute.xlu0 0
  %188 = vperm.xlu0 %187, %v181
  %v189 = vpop.permute.xlu0 %188
  %192 = vset.pattern.permute.xlu0 0
  %193 = vperm.xlu0 %192, %v182
  %v194 = vpop.permute.xlu0 %193
  %197 = vset.pattern.permute.xlu0 0
  %198 = vperm.xlu0 %197, %v183
  %v199 = vpop.permute.xlu0 %198
  %v201 = vperm.slane %v185, 0
  %v202 = vmul.f32 %v189, %v201
  %v203 = vmul.f32 %v194, %v201
  %v204 = vmul.f32 %v199, %v201
  %205 = vset.pattern.permute.xlu0 1
  %206 = vperm.xlu0 %205, %v181
  %v207 = vpop.permute.xlu0 %206
  %209 = vset.pattern.permute.xlu0 1
  %210 = vperm.xlu0 %209, %v182
  %v211 = vpop.permute.xlu0 %210
  %213 = vset.pattern.permute.xlu0 1
  %214 = vperm.xlu0 %213, %v183
  %v215 = vpop.permute.xlu0 %214
  %v217 = vperm.slane %v185, 1
  %v218 = vmul.f32 %v207, %v217
  %v219 = vmul.f32 %v211, %v217
  %v220 = vmul.f32 %v215, %v217
  %v221 = vadd.f32 %v202, %v218
  %v222 = vadd.f32 %v203, %v219
  %v223 = vadd.f32 %v204, %v220
  %224 = vset.pattern.permute.xlu0 2
  %225 = vperm.xlu0 %224, %v181
  %v226 = vpop.permute.xlu0 %225
  %228 = vset.pattern.permute.xlu0 2
  %229 = vperm.xlu0 %228, %v182
  %v230 = vpop.permute.xlu0 %229
  %232 = vset.pattern.permute.xlu0 2
  %233 = vperm.xlu0 %232, %v183
  %v234 = vpop.permute.xlu0 %233
  %v236 = vperm.slane %v185, 2
  %v237 = vmul.f32 %v226, %v236
  %v238 = vmul.f32 %v230, %v236
  %v239 = vmul.f32 %v234, %v236
  %v240 = vadd.f32 %v221, %v237
  %v241 = vadd.f32 %v222, %v238
  %v242 = vadd.f32 %v223, %v239
  %243 = vset.pattern.permute.xlu0 3
  %244 = vperm.xlu0 %243, %v181
  %v245 = vpop.permute.xlu0 %244
  %247 = vset.pattern.permute.xlu0 3
  %248 = vperm.xlu0 %247, %v182
  %v249 = vpop.permute.xlu0 %248
  %251 = vset.pattern.permute.xlu0 3
  %252 = vperm.xlu0 %251, %v183
  %v253 = vpop.permute.xlu0 %252
  %v255 = vperm.slane %v185, 3
  %v256 = vmul.f32 %v245, %v255
  %v257 = vmul.f32 %v249, %v255
  %v258 = vmul.f32 %v253, %v255
  %v259 = vadd.f32 %v240, %v256
  %v260 = vadd.f32 %v241, %v257
  %v261 = vadd.f32 %v242, %v258
  %s262 = scalar_lea.vmem %s2, 48
  %263 = vst [vmem:[%s262] sm:$0xff] %v259
  %264 = vst [vmem:[%s262 + $0x8] sm:$0xff] %v260
  %265 = vst [vmem:[%s262 + $0x10] sm:$0xff] %v261
  %s266 = scalar_lea.vmem %s0, 72
  %v267 = vld [vmem:[%s266] sm:$0xff]
  %v268 = vld [vmem:[%s266 + $0x8] sm:$0xff]
  %v269 = vld [vmem:[%s266 + $0x10] sm:$0xff]
  %s270 = scalar_lea.vmem %s1, 12
  %v271 = vld [vmem:[%s270] sm:$0xf]
  %273 = vset.pattern.permute.xlu0 0
  %274 = vperm.xlu0 %273, %v267
  %v275 = vpop.permute.xlu0 %274
  %278 = vset.pattern.permute.xlu0 0
  %279 = vperm.xlu0 %278, %v268
  %v280 = vpop.permute.xlu0 %279
  %283 = vset.pattern.permute.xlu0 0
  %284 = vperm.xlu0 %283, %v269
  %v285 = vpop.permute.xlu0 %284
  %v287 = vperm.slane %v271, 0
  %v288 = vmul.f32 %v275, %v287
  %v289 = vmul.f32 %v280, %v287
  %v290 = vmul.f32 %v285, %v287
  %291 = vset.pattern.permute.xlu0 1
  %292 = vperm.xlu0 %291, %v267
  %v293 = vpop.permute.xlu0 %292
  %295 = vset.pattern.permute.xlu0 1
  %296 = vperm.xlu0 %295, %v268
  %v297 = vpop.permute.xlu0 %296
  %299 = vset.pattern.permute.xlu0 1
  %300 = vperm.xlu0 %299, %v269
  %v301 = vpop.permute.xlu0 %300
  %v303 = vperm.slane %v271, 1
  %v304 = vmul.f32 %v293, %v303
  %v305 = vmul.f32 %v297, %v303
  %v306 = vmul.f32 %v301, %v303
  %v307 = vadd.f32 %v288, %v304
  %v308 = vadd.f32 %v289, %v305
  %v309 = vadd.f32 %v290, %v306
  %310 = vset.pattern.permute.xlu0 2
  %311 = vperm.xlu0 %310, %v267
  %v312 = vpop.permute.xlu0 %311
  %314 = vset.pattern.permute.xlu0 2
  %315 = vperm.xlu0 %314, %v268
  %v316 = vpop.permute.xlu0 %315
  %318 = vset.pattern.permute.xlu0 2
  %319 = vperm.xlu0 %318, %v269
  %v320 = vpop.permute.xlu0 %319
  %v322 = vperm.slane %v271, 2
  %v323 = vmul.f32 %v312, %v322
  %v324 = vmul.f32 %v316, %v322
  %v325 = vmul.f32 %v320, %v322
  %v326 = vadd.f32 %v307, %v323
  %v327 = vadd.f32 %v308, %v324
  %v328 = vadd.f32 %v309, %v325
  %329 = vset.pattern.permute.xlu0 3
  %330 = vperm.xlu0 %329, %v267
  %v331 = vpop.permute.xlu0 %330
  %333 = vset.pattern.permute.xlu0 3
  %334 = vperm.xlu0 %333, %v268
  %v335 = vpop.permute.xlu0 %334
  %337 = vset.pattern.permute.xlu0 3
  %338 = vperm.xlu0 %337, %v269
  %v339 = vpop.permute.xlu0 %338
  %v341 = vperm.slane %v271, 3
  %v342 = vmul.f32 %v331, %v341
  %v343 = vmul.f32 %v335, %v341
  %v344 = vmul.f32 %v339, %v341
  %v345 = vadd.f32 %v326, %v342
  %v346 = vadd.f32 %v327, %v343
  %v347 = vadd.f32 %v328, %v344
  %s348 = scalar_lea.vmem %s2, 72
  %349 = vst [vmem:[%s348] sm:$0xff] %v345
  %350 = vst [vmem:[%s348 + $0x8] sm:$0xff] %v346
  %351 = vst [vmem:[%s348 + $0x10] sm:$0xff] %v347
  // Predicated region
  $region10: #{barrett_forward.1} parent=0 // pred_check
    _
  $region11: #{barrett_forward.1} parent=0 // pred_check_branch
    %353 = sbr.rel (0) target = $region13
  $region12: #{barrett_forward.1} parent=0 // pred_region
    _
  $region13: #{barrett_forward.1} parent=0 // pred_fallthru
    _
  // Predicated region
  $region14: #{barrett_forward.1} parent=0 // pred_check
    _
  $region15: #{barrett_forward.1} parent=0 // pred_check_branch
    %355 = sbr.rel (0) target = $region17
  $region16: #{barrett_forward.1} parent=0 // pred_region
    _
  $region17: #{barrett_forward.1} parent=0 // pred_fallthru
    _

</llo_original>
